<compile_context>
chip_gen: v6e
topology: v6e:2x2x1
jax: 0.10.0
libtpu: 0.0.40
codegen_flags: <defaults>
</compile_context>

<pallas_src>
import functools

import jax
import jax.numpy as jnp
from jax.experimental import pallas as pl
from jax.experimental.pallas import tpu as pltpu


def _round_up(n, m):
    return ((n + m - 1) // m) * m


# ---------------------------------------------------------------------------
# Pallas kernel: entire MLP stack fused.
#   refs = (x_ref, w0, b0, w1, b1, ..., w_{L-1}, b_{L-1}, o_ref)
#   h <- relu(h @ W_i + b_i) for i < L-1 ;  logits = h @ W_{L-1} + b_{L-1}
# BN(eval) is already folded into W_i / b_i. Matmuls accumulate in f32 on the
# MXU; activations never leave the core between layers.
# ---------------------------------------------------------------------------
def _fused_mlp_kernel(*refs, n_layers):
    x_ref = refs[0]
    o_ref = refs[-1]
    compute_dtype = x_ref.dtype
    h = x_ref[...]
    for li in range(n_layers):
        w_ref = refs[1 + 2 * li]
        b_ref = refs[2 + 2 * li]
        acc = jnp.dot(h.astype(w_ref.dtype), w_ref[...],
                      preferred_element_type=jnp.float32)
        acc = acc + b_ref[...]            # folded Linear+BN bias, f32 (1, N)
        if li != n_layers - 1:
            acc = jnp.maximum(acc, 0.0)   # nn.ReLU
            h = acc.astype(compute_dtype)
        else:
            h = acc
    o_ref[...] = h.astype(o_ref.dtype)


def fused_mlp(x, weights, biases, *, tm, out_dtype):
    """x: (B, K0p) activations (K already lane-padded); weights[i]: (Kp_i, Np_i);
    biases[i]: (1, Np_i) f32. Batch edge handled via cdiv grid (masked tiles)."""
    B, K0p = x.shape
    n_layers = len(weights)
    n_last = weights[-1].shape[1]
    grid = (pl.cdiv(B, tm),)

    # Constant index_map -> the second pipeline buffer is never used; keep the
    # resident weights/biases single-buffered to halve their VMEM footprint.
    resident_kwargs = (
        {"pipeline_mode": pl.Buffered(1)} if hasattr(pl, "Buffered") else {}
    )

    in_specs = [pl.BlockSpec((tm, K0p), lambda m: (m, 0))]
    args = [x]
    for w, b in zip(weights, biases):
        kp, np_ = w.shape
        assert kp % 128 == 0 and np_ % 128 == 0
        in_specs.append(pl.BlockSpec((kp, np_), lambda m: (0, 0), **resident_kwargs))
        in_specs.append(pl.BlockSpec((1, np_), lambda m: (0, 0), **resident_kwargs))
        args.extend([w, b])

    # VMEM budget: resident weights/biases (single-buffered) + double-buffered
    # x/out tiles + slack for Mosaic scratch and inter-layer activations.
    resident_bytes = sum(int(a.size) * a.dtype.itemsize for a in args[1:])
    io_bytes = 2 * (tm * K0p * x.dtype.itemsize
                    + tm * n_last * jnp.dtype(out_dtype).itemsize)
    slack = 8 << 20
    try:
        cap = int(pltpu.get_tpu_info().vmem_capacity_bytes * 0.85)
    except Exception:
        cap = 54 << 20  # conservative: fits v7x's 64 MiB per-TC VMEM
    vmem_limit = int(min(max(resident_bytes + io_bytes + slack, 32 << 20), cap))

    kernel = functools.partial(_fused_mlp_kernel, n_layers=n_layers)
    return pl.pallas_call(
        kernel,
        out_shape=jax.ShapeDtypeStruct((B, n_last), out_dtype),
        grid=grid,
        in_specs=in_specs,
        out_specs=pl.BlockSpec((tm, n_last), lambda m: (m, 0)),
        compiler_params=pltpu.CompilerParams(
            dimension_semantics=("parallel",),   # batch tiles shard across TCs (v7x)
            vmem_limit_bytes=vmem_limit,
        ),
    )(*args)


# ---------------------------------------------------------------------------
# Parameter construction (deterministic, synthetic) with BN folding + padding.
# Weights stored as (K, N) (transposed vs PyTorch's (N, K)) so each layer is
# x @ W + b; kept in f32 here, cast to the compute dtype at call time.
# ---------------------------------------------------------------------------
def init_params(key, vocab_size, dim_embedding, max_seq_len, hiddens, num_class,
                eps=1e-5):
    dims = [max_seq_len * dim_embedding] + list(hiddens) + [num_class]
    n_layers = len(dims) - 1
    keys = jax.random.split(key, 1 + 6 * n_layers)
    emb = jax.random.normal(keys[0], (vocab_size, dim_embedding), jnp.float32) * 0.5

    padded = [_round_up(d, 128) for d in dims]   # lane-dense feature dims
    weights, biases = [], []
    for li in range(n_layers):
        k = keys[1 + 6 * li: 1 + 6 * (li + 1)]
        K, N = dims[li], dims[li + 1]
        w = jax.random.normal(k[0], (K, N), jnp.float32) * (1.0 / jnp.sqrt(K))
        b = jax.random.normal(k[1], (N,), jnp.float32) * 0.1
        if li != n_layers - 1:
            # eval-mode BatchNorm1d folded into the Linear:
            #   y = (x@W + b) * scale + shift  ==  x @ (W*scale) + (b*scale + shift)
            gamma = 1.0 + 0.1 * jax.random.normal(k[2], (N,), jnp.float32)
            beta = 0.1 * jax.random.normal(k[3], (N,), jnp.float32)
            r_mean = 0.1 * jax.random.normal(k[4], (N,), jnp.float32)
            r_var = 1.0 + 0.1 * jnp.abs(jax.random.normal(k[5], (N,), jnp.float32))
            scale = gamma / jnp.sqrt(r_var + eps)
            shift = beta - r_mean * scale
            w = w * scale[None, :]
            b = b * scale + shift
        Kp, Np = padded[li], padded[li + 1]
        wp = jnp.zeros((Kp, Np), jnp.float32).at[:K, :N].set(w)
        bp = jnp.zeros((1, Np), jnp.float32).at[0, :N].set(b)
        weights.append(wp)
        biases.append(bp)
    return emb, weights, biases


# ---------------------------------------------------------------------------
# Forward pass. Embedding row-gather + flatten stays as plain-JAX glue
# (tiny at D=16); the whole MLP runs in the fused Pallas kernel.
# ---------------------------------------------------------------------------
def _choose_tm(B, sub, cap):
    if B > cap:
        return cap
    if B >= 64:
        # split into >=2 grid steps so v7x's two TensorCores both get work
        return _round_up(-(-B // 2), sub)
    return _round_up(B, sub)


def sequence_mlp_forward(token_ids, emb_table, weights, biases, num_class,
                         compute_dtype=jnp.bfloat16):
    B = token_ids.shape[0]
    h = jnp.take(emb_table, token_ids, axis=0).reshape(B, -1)   # (B, S*D)
    K0 = h.shape[1]
    K0p = weights[0].shape[0]

    x = h.astype(compute_dtype)
    if K0p > K0:
        # Pad COLUMNS with explicit zeros (they multiply real rows against W0's
        # zero rows, so uninitialized contents would be unsafe). Batch is NOT
        # padded: the cdiv grid masks the edge tile and garbage pad rows only
        # produce garbage output rows that are sliced off below.
        x = jnp.pad(x, ((0, 0), (0, K0p - K0)))

    bf16 = jnp.dtype(compute_dtype) == jnp.dtype(jnp.bfloat16)
    sub = 16 if bf16 else 8                 # sublane quantum for the dtype
    cap = 512 if bf16 else 256              # amortize per-step overhead / MXU pushes
    tm = _choose_tm(B, sub, cap)

    w_c = [w.astype(compute_dtype) for w in weights]   # bf16: full MXU rate, half DMA
    out_dtype = compute_dtype if bf16 else jnp.float32
    out = fused_mlp(x, w_c, biases, tm=tm, out_dtype=out_dtype)   # (B, N_last_padded)
    return out[:, :num_class].astype(jnp.float32)


# Pure-JAX reference (uses the same folded/padded f32 weights).
def _reference(token_ids, emb_table, weights, biases, num_class):
    B = token_ids.shape[0]
    h = jnp.take(emb_table, token_ids, axis=0).reshape(B, -1)
    K0 = h.shape[1]
    K0p = weights[0].shape[0]
    x = jnp.zeros((B, K0p), jnp.float32).at[:, :K0].set(h)
    n_layers = len(weights)
    for li, (w, b) in enumerate(zip(weights, biases)):
        x = x @ w.astype(jnp.float32) + b
        if li != n_layers - 1:
            x = jnp.maximum(x, 0.0)
    return x[:, :num_class]


if __name__ == "__main__":
    # Small, module-consistent shapes
    vocab_size = 50
    dim_embedding = 16
    max_seq_len = 8
    hiddens = [64, 32]
    num_class = 4
    batch = 2

    key = jax.random.PRNGKey(0)
    k_param, k_data = jax.random.split(key)
    emb_table, weights, biases = init_params(
        k_param, vocab_size, dim_embedding, max_seq_len, hiddens, num_class)
    token_ids = jax.random.randint(k_data, (batch, max_seq_len), 0, vocab_size,
                                   dtype=jnp.int32)

    ref = _reference(token_ids, emb_table, weights, biases, num_class)

    # Default path: bf16 weights/activations, f32 MXU accumulation (fast on all gens)
    logits_bf16 = sequence_mlp_forward(token_ids, emb_table, weights, biases,
                                       num_class)
    logits_bf16 = jax.block_until_ready(logits_bf16)
    assert logits_bf16.shape == (batch, num_class)
    assert jnp.allclose(logits_bf16, ref, atol=5e-2, rtol=5e-2)

    # f32 path (for logit-precision-sensitive use; slower multi-pass MXU)
    logits_f32 = sequence_mlp_forward(token_ids, emb_table, weights, biases,
                                      num_class, compute_dtype=jnp.float32)
    logits_f32 = jax.block_until_ready(logits_f32)
    assert logits_f32.shape == (batch, num_class)
    assert jnp.allclose(logits_f32, ref, atol=1e-3, rtol=1e-3)

    print("KERNEL_OK")
</pallas_src>

<mosaic_0001>
module attributes {stable_mosaic.version = 11 : i64} {
  func.func @_fused_mlp_kernel(%arg0: i32, %arg1: memref<16x128xbf16, #tpu.memory_space<vmem>>, %arg2: memref<128x128xbf16, #tpu.memory_space<vmem>>, %arg3: memref<1x128xf32, #tpu.memory_space<vmem>>, %arg4: memref<128x128xbf16, #tpu.memory_space<vmem>>, %arg5: memref<1x128xf32, #tpu.memory_space<vmem>>, %arg6: memref<128x128xbf16, #tpu.memory_space<vmem>>, %arg7: memref<1x128xf32, #tpu.memory_space<vmem>>, %arg8: memref<16x128xbf16, #tpu.memory_space<vmem>>) attributes {dimension_semantics = [#tpu.dimension_semantics<parallel>], iteration_bounds = array<i64: 1>, scalar_prefetch = 0 : i64, scratch_operands = 0 : i64, tpu.core_type = #tpu.core_type<tc>, window_params = [{transform_indices = @transform_0, window_bounds = array<i64: 16, 128>}, {pipeline_mode = #tpu.pipeline_mode<synchronous>, transform_indices = @transform_1, window_bounds = array<i64: 128, 128>}, {pipeline_mode = #tpu.pipeline_mode<synchronous>, transform_indices = @transform_2, window_bounds = array<i64: 1, 128>}, {pipeline_mode = #tpu.pipeline_mode<synchronous>, transform_indices = @transform_3, window_bounds = array<i64: 128, 128>}, {pipeline_mode = #tpu.pipeline_mode<synchronous>, transform_indices = @transform_4, window_bounds = array<i64: 1, 128>}, {pipeline_mode = #tpu.pipeline_mode<synchronous>, transform_indices = @transform_5, window_bounds = array<i64: 128, 128>}, {pipeline_mode = #tpu.pipeline_mode<synchronous>, transform_indices = @transform_6, window_bounds = array<i64: 1, 128>}, {transform_indices = @transform_7, window_bounds = array<i64: 16, 128>}]} {
    %c0 = arith.constant 0 : index
    %c0_0 = arith.constant 0 : index
    %0 = vector.load %arg1[%c0, %c0_0] : memref<16x128xbf16, #tpu.memory_space<vmem>>, vector<16x128xbf16>
    %c0_1 = arith.constant 0 : index
    %c0_2 = arith.constant 0 : index
    %1 = vector.load %arg2[%c0_1, %c0_2] : memref<128x128xbf16, #tpu.memory_space<vmem>>, vector<128x128xbf16>
    %cst = arith.constant dense<0.000000e+00> : vector<16x128xf32>
    %2 = tpu.matmul %0, %1, %cst {dimension_numbers = #tpu.dot_dimension_numbers<[1], [0], [0], [1], [0, 0, 1, 1], [], []>} : vector<16x128xbf16>, vector<128x128xbf16>, vector<16x128xf32> -> vector<16x128xf32>
    %c0_3 = arith.constant 0 : index
    %c0_4 = arith.constant 0 : index
    %3 = vector.load %arg3[%c0_3, %c0_4] : memref<1x128xf32, #tpu.memory_space<vmem>>, vector<1x128xf32>
    %4 = vector.broadcast %3 : vector<1x128xf32> to vector<16x128xf32>
    %5 = arith.addf %2, %4 : vector<16x128xf32>
    %cst_5 = arith.constant 0.000000e+00 : f32
    %6 = vector.broadcast %cst_5 : f32 to vector<16x128xf32>
    %7 = arith.maximumf %5, %6 : vector<16x128xf32>
    %8 = arith.truncf %7 : vector<16x128xf32> to vector<16x128xbf16>
    %c0_6 = arith.constant 0 : index
    %c0_7 = arith.constant 0 : index
    %9 = vector.load %arg4[%c0_6, %c0_7] : memref<128x128xbf16, #tpu.memory_space<vmem>>, vector<128x128xbf16>
    %cst_8 = arith.constant dense<0.000000e+00> : vector<16x128xf32>
    %10 = tpu.matmul %8, %9, %cst_8 {dimension_numbers = #tpu.dot_dimension_numbers<[1], [0], [0], [1], [0, 0, 1, 1], [], []>} : vector<16x128xbf16>, vector<128x128xbf16>, vector<16x128xf32> -> vector<16x128xf32>
    %c0_9 = arith.constant 0 : index
    %c0_10 = arith.constant 0 : index
    %11 = vector.load %arg5[%c0_9, %c0_10] : memref<1x128xf32, #tpu.memory_space<vmem>>, vector<1x128xf32>
    %12 = vector.broadcast %11 : vector<1x128xf32> to vector<16x128xf32>
    %13 = arith.addf %10, %12 : vector<16x128xf32>
    %cst_11 = arith.constant 0.000000e+00 : f32
    %14 = vector.broadcast %cst_11 : f32 to vector<16x128xf32>
    %15 = arith.maximumf %13, %14 : vector<16x128xf32>
    %16 = arith.truncf %15 : vector<16x128xf32> to vector<16x128xbf16>
    %c0_12 = arith.constant 0 : index
    %c0_13 = arith.constant 0 : index
    %17 = vector.load %arg6[%c0_12, %c0_13] : memref<128x128xbf16, #tpu.memory_space<vmem>>, vector<128x128xbf16>
    %cst_14 = arith.constant dense<0.000000e+00> : vector<16x128xf32>
    %18 = tpu.matmul %16, %17, %cst_14 {dimension_numbers = #tpu.dot_dimension_numbers<[1], [0], [0], [1], [0, 0, 1, 1], [], []>} : vector<16x128xbf16>, vector<128x128xbf16>, vector<16x128xf32> -> vector<16x128xf32>
    %c0_15 = arith.constant 0 : index
    %c0_16 = arith.constant 0 : index
    %19 = vector.load %arg7[%c0_15, %c0_16] : memref<1x128xf32, #tpu.memory_space<vmem>>, vector<1x128xf32>
    %20 = vector.broadcast %19 : vector<1x128xf32> to vector<16x128xf32>
    %21 = arith.addf %18, %20 : vector<16x128xf32>
    %22 = arith.truncf %21 : vector<16x128xf32> to vector<16x128xbf16>
    %c0_17 = arith.constant 0 : index
    %c0_18 = arith.constant 0 : index
    %23 = vector.load %arg8[%c0_17, %c0_18] : memref<16x128xbf16, #tpu.memory_space<vmem>>, vector<16x128xbf16>
    tpu.vector_store %arg8[%c0_17, %c0_18], %22 {strides = array<i32>} : memref<16x128xbf16, #tpu.memory_space<vmem>>, vector<16x128xbf16>,
    return
  }
  func.func @transform_0(%arg0: i32) -> (i32, i32) {
    %c0_i32 = arith.constant 0 : i32
    %c0_i32_0 = arith.constant 0 : i32
    return %arg0, %c0_i32 : i32, i32
  }
  func.func @transform_1(%arg0: i32) -> (i32, i32) {
    %c0_i32 = arith.constant 0 : i32
    %c0_i32_0 = arith.constant 0 : i32
    %c0_i32_1 = arith.constant 0 : i32
    return %c0_i32, %c0_i32_0 : i32, i32
  }
  func.func @transform_2(%arg0: i32) -> (i32, i32) {
    %c0_i32 = arith.constant 0 : i32
    %c0_i32_0 = arith.constant 0 : i32
    %c0_i32_1 = arith.constant 0 : i32
    return %c0_i32, %c0_i32_0 : i32, i32
  }
  func.func @transform_3(%arg0: i32) -> (i32, i32) {
    %c0_i32 = arith.constant 0 : i32
    %c0_i32_0 = arith.constant 0 : i32
    %c0_i32_1 = arith.constant 0 : i32
    return %c0_i32, %c0_i32_0 : i32, i32
  }
  func.func @transform_4(%arg0: i32) -> (i32, i32) {
    %c0_i32 = arith.constant 0 : i32
    %c0_i32_0 = arith.constant 0 : i32
    %c0_i32_1 = arith.constant 0 : i32
    return %c0_i32, %c0_i32_0 : i32, i32
  }
  func.func @transform_5(%arg0: i32) -> (i32, i32) {
    %c0_i32 = arith.constant 0 : i32
    %c0_i32_0 = arith.constant 0 : i32
    %c0_i32_1 = arith.constant 0 : i32
    return %c0_i32, %c0_i32_0 : i32, i32
  }
  func.func @transform_6(%arg0: i32) -> (i32, i32) {
    %c0_i32 = arith.constant 0 : i32
    %c0_i32_0 = arith.constant 0 : i32
    %c0_i32_1 = arith.constant 0 : i32
    return %c0_i32, %c0_i32_0 : i32, i32
  }
  func.func @transform_7(%arg0: i32) -> (i32, i32) {
    %c0_i32 = arith.constant 0 : i32
    %c0_i32_0 = arith.constant 0 : i32
    return %arg0, %c0_i32 : i32, i32
  }
}

</mosaic_0001>

<llo_original>
// kernel: tpu_custom_call.1
$region0: #{tpu_custom_call.1}
  #allocation0 [shape = 'u32[]', space=smem, size = 0x4, offset = 0x4, fixed_abs, tag = 'smem constant byte address 0x4 - core index']
  #allocation1 [shape = 'u32[144,128]{1,0:T(1,128)}', space=vmem, size = 0x12000, scoped, tag = 'internal scratch']
  %s0 = inlined_call_operand.hbm [shape: bf16[2,128], index: 0, kind: input, shape index: {}]
  %s1 = inlined_call_operand.hbm [shape: bf16[128,128], index: 1, kind: input, shape index: {}]
  %s2 = inlined_call_operand.vmem [shape: f32[1,128], index: 2, kind: input, shape index: {}]
  %s3 = inlined_call_operand.hbm [shape: bf16[128,128], index: 3, kind: input, shape index: {}]
  %s4 = inlined_call_operand.vmem [shape: f32[1,128], index: 4, kind: input, shape index: {}]
  %s5 = inlined_call_operand.hbm [shape: bf16[128,128], index: 5, kind: input, shape index: {}]
  %s6 = inlined_call_operand.vmem [shape: f32[1,128], index: 6, kind: input, shape index: {}]
  %s7 = inlined_call_operand.hbm [shape: bf16[2,128], index: 7, kind: output, shape index: {}]
  %s8 = sld [smem:[#allocation0]]
  $region54: #{tpu_custom_call.1} parent=0
    _
  %s10 = ssub.s32 1, %s8
  %s11 = scalar_select 0, %s10, %s8
  $region1: #{tpu_custom_call.1} parent=0
    #allocation2 [shape = 'u8[4096]{0}', space=vmem, size = 0x1000, scoped, tag = 'input window, operand 0, single buffered']
    #allocation3 [shape = 's32[1]{0}', space=sflag, size = 0x4, scoped, tag = 'scoped memory for tpu_custom_call.1']
    #allocation4 [shape = 's32[1]{0}', space=sflag, size = 0x4, scoped, tag = 'scoped memory for tpu_custom_call.1']
    #allocation5 [shape = 'u8[32768]{0}', space=vmem, size = 0x8000, scoped, tag = 'input window, operand 1, single buffered']
    #allocation6 [shape = 's32[1]{0}', space=sflag, size = 0x4, scoped, tag = 'scoped memory for tpu_custom_call.1']
    #allocation7 [shape = 'u8[32768]{0}', space=vmem, size = 0x8000, scoped, tag = 'input window, operand 3, single buffered']
    #allocation8 [shape = 'u8[32768]{0}', space=vmem, size = 0x8000, scoped, tag = 'input window, operand 5, single buffered']
    #allocation9 [shape = 's32[1]{0}', space=sflag, size = 0x4, scoped, tag = 'scoped memory for tpu_custom_call.1']
    #allocation10 [shape = 'u8[4096]{0}', space=vmem, size = 0x1000, scoped, tag = 'output window, operand 0, single buffered']
    %12 = vsyncpa [#allocation3], 0
    %13 = vsyncpa [#allocation6], 0
    %14 = vsyncpa [#allocation9], 0
    %15 = vsyncpa [#allocation4], 0
    // Predicated region
    $region2: #{tpu_custom_call.1} parent=1 // pred_check
      _
    $region3: #{tpu_custom_call.1} parent=1 // pred_check_branch
      %17 = sbr.rel (0) target = $region5
    $region4: #{tpu_custom_call.1} parent=1 // pred_region
      %s19 = ssub.s32 128, 16
      %20 = vsyncadd [#allocation3], %s19
      %s21 = sshll.u32 [#allocation2], 4
      %s22 = int_to_ptr.vmem [resolvable:$true] %s21
      %27 = dma.hbm_to_vmem [thread:$0]  %s0, 16, %s22, [#allocation3], 16, 16, 1
    $region5: #{tpu_custom_call.1} parent=1 // pred_fallthru
      _
    // Predicated region
    $region6: #{tpu_custom_call.1} parent=1 // pred_check
      _
    $region7: #{tpu_custom_call.1} parent=1 // pred_check_branch
      %29 = sbr.rel (0) target = $region9
    $region8: #{tpu_custom_call.1} parent=1 // pred_region
      %s31 = ssub.s32 1024, 1024
      %32 = vsyncadd [#allocation6], %s31
      %s33 = sshll.u32 [#allocation5], 4
      %s34 = int_to_ptr.vmem [resolvable:$true] %s33
      %39 = dma.hbm_to_vmem [thread:$0]  %s1, 1024, %s34, [#allocation6], 64, 64, 4
    $region9: #{tpu_custom_call.1} parent=1 // pred_fallthru
      _
    // Predicated region
    $region10: #{tpu_custom_call.1} parent=1 // pred_check
      _
    $region11: #{tpu_custom_call.1} parent=1 // pred_check_branch
      %41 = sbr.rel (0) target = $region13
    $region12: #{tpu_custom_call.1} parent=1 // pred_region
      _
    $region13: #{tpu_custom_call.1} parent=1 // pred_fallthru
      _
    // Predicated region
    $region14: #{tpu_custom_call.1} parent=1 // pred_check
      _
    $region15: #{tpu_custom_call.1} parent=1 // pred_check_branch
      %43 = sbr.rel (0) target = $region17
    $region16: #{tpu_custom_call.1} parent=1 // pred_region
      %s45 = ssub.s32 1024, 1024
      %46 = vsyncadd [#allocation6], %s45
      %s47 = sshll.u32 [#allocation7], 4
      %s48 = int_to_ptr.vmem [resolvable:$true] %s47
      %53 = dma.hbm_to_vmem [thread:$0]  %s3, 1024, %s48, [#allocation6], 64, 64, 4
    $region17: #{tpu_custom_call.1} parent=1 // pred_fallthru
      _
    // Predicated region
    $region18: #{tpu_custom_call.1} parent=1 // pred_check
      _
    $region19: #{tpu_custom_call.1} parent=1 // pred_check_branch
      %55 = sbr.rel (0) target = $region21
    $region20: #{tpu_custom_call.1} parent=1 // pred_region
      _
    $region21: #{tpu_custom_call.1} parent=1 // pred_fallthru
      _
    // Predicated region
    $region22: #{tpu_custom_call.1} parent=1 // pred_check
      _
    $region23: #{tpu_custom_call.1} parent=1 // pred_check_branch
      %57 = sbr.rel (0) target = $region25
    $region24: #{tpu_custom_call.1} parent=1 // pred_region
      %s59 = ssub.s32 1024, 1024
      %60 = vsyncadd [#allocation9], %s59
      %s61 = sshll.u32 [#allocation8], 4
      %s62 = int_to_ptr.vmem [resolvable:$true] %s61
      %67 = dma.hbm_to_vmem [thread:$0]  %s5, 1024, %s62, [#allocation9], 64, 64, 4
    $region25: #{tpu_custom_call.1} parent=1 // pred_fallthru
      _
    // Predicated region
    $region26: #{tpu_custom_call.1} parent=1 // pred_check
      _
    $region27: #{tpu_custom_call.1} parent=1 // pred_check_branch
      %69 = sbr.rel (0) target = $region29
    $region28: #{tpu_custom_call.1} parent=1 // pred_region
      _
    $region29: #{tpu_custom_call.1} parent=1 // pred_fallthru
      _
    // Predicated region
    $region30: #{tpu_custom_call.1} parent=1 // pred_check
      _
    $region31: #{tpu_custom_call.1} parent=1 // pred_check_branch
      %71 = sbr.rel (0) target = $region33
    $region32: #{tpu_custom_call.1} parent=1 // pred_region
      %72 = dma.done [#allocation3], 128
    $region33: #{tpu_custom_call.1} parent=1 // pred_fallthru
      _
    // Predicated region
    $region34: #{tpu_custom_call.1} parent=1 // pred_check
      _
    $region35: #{tpu_custom_call.1} parent=1 // pred_check_branch
      %74 = sbr.rel (0) target = $region37
    $region36: #{tpu_custom_call.1} parent=1 // pred_region
      %75 = dma.done [#allocation6], 1024
    $region37: #{tpu_custom_call.1} parent=1 // pred_fallthru
      _
    // Predicated region
    $region38: #{tpu_custom_call.1} parent=1 // pred_check
      _
    $region39: #{tpu_custom_call.1} parent=1 // pred_check_branch
      %77 = sbr.rel (0) target = $region41
    $region40: #{tpu_custom_call.1} parent=1 // pred_region
      %78 = dma.done [#allocation6], 1024
    $region41: #{tpu_custom_call.1} parent=1 // pred_fallthru
      _
    // Predicated region
    $region42: #{tpu_custom_call.1} parent=1 // pred_check
      _
    $region43: #{tpu_custom_call.1} parent=1 // pred_check_branch
      %80 = sbr.rel (0) target = $region45
    $region44: #{tpu_custom_call.1} parent=1 // pred_region
      %81 = dma.done [#allocation9], 1024
    $region45: #{tpu_custom_call.1} parent=1 // pred_fallthru
      _
    %v83 = vld [vmem:[#allocation2] sm:$0x1]
    %v84 = vld [vmem:[#allocation2 + $0x1] sm:$0x1]
    %v85 = vld [vmem:[#allocation2 + $0x2] sm:$0x1]
    %v86 = vld [vmem:[#allocation2 + $0x3] sm:$0x1]
    %v87 = vld [vmem:[#allocation2 + $0x4] sm:$0x1]
    %v88 = vld [vmem:[#allocation2 + $0x5] sm:$0x1]
    %v89 = vld [vmem:[#allocation2 + $0x6] sm:$0x1]
    %v90 = vld [vmem:[#allocation2 + $0x7] sm:$0x1]
    %v91 = vld [vmem:[#allocation5] sm:$0xf]
    %v92 = vld [vmem:[#allocation5 + $0x4] sm:$0xf]
    %v93 = vld [vmem:[#allocation5 + $0x8] sm:$0xf]
    %v94 = vld [vmem:[#allocation5 + $0xc] sm:$0xf]
    %v95 = vld [vmem:[#allocation5 + $0x10] sm:$0xf]
    %v96 = vld [vmem:[#allocation5 + $0x14] sm:$0xf]
    %v97 = vld [vmem:[#allocation5 + $0x18] sm:$0xf]
    %v98 = vld [vmem:[#allocation5 + $0x1c] sm:$0xf]
    %v99 = vld [vmem:[#allocation5 + $0x20] sm:$0xf]
    %v100 = vld [vmem:[#allocation5 + $0x24] sm:$0xf]
    %v101 = vld [vmem:[#allocation5 + $0x28] sm:$0xf]
    %v102 = vld [vmem:[#allocation5 + $0x2c] sm:$0xf]
    %v103 = vld [vmem:[#allocation5 + $0x30] sm:$0xf]
    %v104 = vld [vmem:[#allocation5 + $0x34] sm:$0xf]
    %v105 = vld [vmem:[#allocation5 + $0x38] sm:$0xf]
    %v106 = vld [vmem:[#allocation5 + $0x3c] sm:$0xf]
    %v107 = vld [vmem:[%s2] sm:$0x1]
    %v109 = vlaneseq
    %v110 = vshrl.u32 %v109, 7
    %v111 = vsub.s32 0, %v110
    %v112 = vrot.slane %v107, %v111
    %v122 = vcombine.low %v83, %v84
    %v123 = vcombine.low %v85, %v86
    %v124 = vcombine.low %v87, %v88
    %v125 = vcombine.low %v89, %v90
    %v127 = vunpack.c.l.s4 1966171168
    %v128 = vunpack.c.0.s8 %v127
    %v129 = vlaneseq
    %v130 = vshrl.u32 %v129, 7
    %v131 = vsub.s32 %v128, %v130
    %v132 = vrot.slane %v122, %v131
    %v134 = vunpack.c.l.s4 1966171168
    %v135 = vunpack.c.0.s8 %v134
    %v136 = vlaneseq
    %v137 = vshrl.u32 %v136, 7
    %v138 = vsub.s32 %v135, %v137
    %v139 = vrot.slane %v123, %v138
    %v141 = vunpack.c.l.s4 1966171168
    %v142 = vunpack.c.0.s8 %v141
    %v143 = vlaneseq
    %v144 = vshrl.u32 %v143, 7
    %v145 = vsub.s32 %v142, %v144
    %v146 = vrot.slane %v124, %v145
    %v148 = vunpack.c.l.s4 1966171168
    %v149 = vunpack.c.0.s8 %v148
    %v150 = vlaneseq
    %v151 = vshrl.u32 %v150, 7
    %v152 = vsub.s32 %v149, %v151
    %v153 = vrot.slane %v125, %v152
    %v154 = vcombine.low %v132, %v139
    %v155 = vcombine.low %v146, %v153
    %v157 = vunpack.c.l.s4 1966171168
    %v158 = vunpack.c.0.s8 %v157
    %v159 = vlaneseq
    %v160 = vshrl.u32 %v159, 7
    %v161 = vsub.s32 %v158, %v160
    %v162 = vrot.slane %v154, %v161
    %v164 = vunpack.c.l.s4 1966171168
    %v165 = vunpack.c.0.s8 %v164
    %v166 = vlaneseq
    %v167 = vshrl.u32 %v166, 7
    %v168 = vsub.s32 %v165, %v167
    %v169 = vrot.slane %v155, %v168
    %v170 = vcombine.low %v162, %v169
    %v188 = vunpack.c.l.b16 %v91
    %v189 = vunpack.c.l.b16 %v92
    %v190 = vunpack.c.l.b16 %v93
    %v191 = vunpack.c.l.b16 %v94
    %v192 = vunpack.c.l.b16 %v95
    %v193 = vunpack.c.l.b16 %v96
    %v194 = vunpack.c.l.b16 %v97
    %v195 = vunpack.c.l.b16 %v98
    %v196 = vunpack.c.l.b16 %v99
    %v197 = vunpack.c.l.b16 %v100
    %v198 = vunpack.c.l.b16 %v101
    %v199 = vunpack.c.l.b16 %v102
    %v200 = vunpack.c.l.b16 %v103
    %v201 = vunpack.c.l.b16 %v104
    %v202 = vunpack.c.l.b16 %v105
    %v203 = vunpack.c.l.b16 %v106
    %v204 = vpack.c.b16 %v189, %v188
    %v205 = vpack.c.b16 %v191, %v190
    %v206 = vpack.c.b16 %v193, %v192
    %v207 = vpack.c.b16 %v195, %v194
    %v208 = vpack.c.b16 %v197, %v196
    %v209 = vpack.c.b16 %v199, %v198
    %v210 = vpack.c.b16 %v201, %v200
    %v211 = vpack.c.b16 %v203, %v202
    %220 = vmatprep.subr.bf16.mxu0 0
    %221 = vmatpush1.bf16.msra.mxu0 %v211
    %222 = vmatprep.subr.bf16.mxu0 0
    %223 = vmatpush1.bf16.msra.mxu0 %v210
    %224 = vmatprep.subr.bf16.mxu0 0
    %225 = vmatpush1.bf16.msra.mxu0 %v209
    %226 = vmatprep.subr.bf16.mxu0 0
    %227 = vmatpush1.bf16.msra.mxu0 %v208
    %228 = vmatprep.subr.bf16.mxu0 0
    %229 = vmatpush1.bf16.msra.mxu0 %v207
    %230 = vmatprep.subr.bf16.mxu0 0
    %231 = vmatpush1.bf16.msra.mxu0 %v206
    %232 = vmatprep.subr.bf16.mxu0 0
    %233 = vmatpush1.bf16.msra.mxu0 %v205
    %234 = vmatprep.subr.bf16.mxu0 0
    %235 = vmatpush1.bf16.msra.mxu0 %v204
    %236 = vmatprep.subr.bf16.mxu0 0
    %237 = vmatpush2.bf16.msra.mxu0 0
    %238 = vmatprep.subr.bf16.mxu0 0
    %239 = vmatpush2.bf16.msra.mxu0 0
    %240 = vmatprep.subr.bf16.mxu0 0
    %241 = vmatpush2.bf16.msra.mxu0 0
    %242 = vmatprep.subr.bf16.mxu0 0
    %243 = vmatpush2.bf16.msra.mxu0 0
    %244 = vmatprep.subr.bf16.mxu0 0
    %245 = vmatpush2.bf16.msra.mxu0 0
    %246 = vmatprep.subr.bf16.mxu0 0
    %247 = vmatpush2.bf16.msra.mxu0 0
    %248 = vmatprep.subr.bf16.mxu0 0
    %249 = vmatpush2.bf16.msra.mxu0 0
    %250 = vmatprep.subr.bf16.mxu0 0
    %251 = vmatpush2.bf16.msra.mxu0 0
    %252 = vmatprep.mubr.bf16.mxu0 0
    %253 = vmatmul.mubr.bf16.gmra.mxu0 %v170
    %v254 = vpop.f32.mrf.mxu0
    %v255 = vadd.f32 %v112, %v254
    %v256 = vpop.f32.mrf.mxu0
    %v257 = vpop.f32.mrf.mxu0
    %v258 = vadd.f32 %v112, %v257
    %v259 = vpop.f32.mrf.mxu0
    %260 = vdwg.mxu0
    %v261 = vmax.f32 %v255, 0.0
    %v262 = vmax.f32 %v258, 0.0
    %v263 = vpack.c.bf16 %v262, %v261
    %v264 = vld [vmem:[#allocation7] sm:$0xf]
    %v265 = vld [vmem:[#allocation7 + $0x4] sm:$0xf]
    %v266 = vld [vmem:[#allocation7 + $0x8] sm:$0xf]
    %v267 = vld [vmem:[#allocation7 + $0xc] sm:$0xf]
    %v268 = vld [vmem:[#allocation7 + $0x10] sm:$0xf]
    %v269 = vld [vmem:[#allocation7 + $0x14] sm:$0xf]
    %v270 = vld [vmem:[#allocation7 + $0x18] sm:$0xf]
    %v271 = vld [vmem:[#allocation7 + $0x1c] sm:$0xf]
    %v272 = vld [vmem:[#allocation7 + $0x20] sm:$0xf]
    %v273 = vld [vmem:[#allocation7 + $0x24] sm:$0xf]
    %v274 = vld [vmem:[#allocation7 + $0x28] sm:$0xf]
    %v275 = vld [vmem:[#allocation7 + $0x2c] sm:$0xf]
    %v276 = vld [vmem:[#allocation7 + $0x30] sm:$0xf]
    %v277 = vld [vmem:[#allocation7 + $0x34] sm:$0xf]
    %v278 = vld [vmem:[#allocation7 + $0x38] sm:$0xf]
    %v279 = vld [vmem:[#allocation7 + $0x3c] sm:$0xf]
    %v280 = vld [vmem:[%s4] sm:$0x1]
    %v282 = vlaneseq
    %v283 = vshrl.u32 %v282, 7
    %v284 = vsub.s32 0, %v283
    %v285 = vrot.slane %v280, %v284
    %v303 = vunpack.c.l.b16 %v264
    %v304 = vunpack.c.l.b16 %v265
    %v305 = vunpack.c.l.b16 %v266
    %v306 = vunpack.c.l.b16 %v267
    %v307 = vunpack.c.l.b16 %v268
    %v308 = vunpack.c.l.b16 %v269
    %v309 = vunpack.c.l.b16 %v270
    %v310 = vunpack.c.l.b16 %v271
    %v311 = vunpack.c.l.b16 %v272
    %v312 = vunpack.c.l.b16 %v273
    %v313 = vunpack.c.l.b16 %v274
    %v314 = vunpack.c.l.b16 %v275
    %v315 = vunpack.c.l.b16 %v276
    %v316 = vunpack.c.l.b16 %v277
    %v317 = vunpack.c.l.b16 %v278
    %v318 = vunpack.c.l.b16 %v279
    %v319 = vpack.c.b16 %v304, %v303
    %v320 = vpack.c.b16 %v306, %v305
    %v321 = vpack.c.b16 %v308, %v307
    %v322 = vpack.c.b16 %v310, %v309
    %v323 = vpack.c.b16 %v312, %v311
    %v324 = vpack.c.b16 %v314, %v313
    %v325 = vpack.c.b16 %v316, %v315
    %v326 = vpack.c.b16 %v318, %v317
    %335 = vmatprep.subr.bf16.mxu0 0
    %336 = vmatpush1.bf16.msra.mxu0 %v326
    %337 = vmatprep.subr.bf16.mxu0 0
    %338 = vmatpush1.bf16.msra.mxu0 %v325
    %339 = vmatprep.subr.bf16.mxu0 0
    %340 = vmatpush1.bf16.msra.mxu0 %v324
    %341 = vmatprep.subr.bf16.mxu0 0
    %342 = vmatpush1.bf16.msra.mxu0 %v323
    %343 = vmatprep.subr.bf16.mxu0 0
    %344 = vmatpush1.bf16.msra.mxu0 %v322
    %345 = vmatprep.subr.bf16.mxu0 0
    %346 = vmatpush1.bf16.msra.mxu0 %v321
    %347 = vmatprep.subr.bf16.mxu0 0
    %348 = vmatpush1.bf16.msra.mxu0 %v320
    %349 = vmatprep.subr.bf16.mxu0 0
    %350 = vmatpush1.bf16.msra.mxu0 %v319
    %351 = vmatprep.subr.bf16.mxu0 0
    %352 = vmatpush2.bf16.msra.mxu0 0
    %353 = vmatprep.subr.bf16.mxu0 0
    %354 = vmatpush2.bf16.msra.mxu0 0
    %355 = vmatprep.subr.bf16.mxu0 0
    %356 = vmatpush2.bf16.msra.mxu0 0
    %357 = vmatprep.subr.bf16.mxu0 0
    %358 = vmatpush2.bf16.msra.mxu0 0
    %359 = vmatprep.subr.bf16.mxu0 0
    %360 = vmatpush2.bf16.msra.mxu0 0
    %361 = vmatprep.subr.bf16.mxu0 0
    %362 = vmatpush2.bf16.msra.mxu0 0
    %363 = vmatprep.subr.bf16.mxu0 0
    %364 = vmatpush2.bf16.msra.mxu0 0
    %365 = vmatprep.subr.bf16.mxu0 0
    %366 = vmatpush2.bf16.msra.mxu0 0
    %367 = vmatprep.mubr.bf16.mxu0 0
    %368 = vmatmul.mubr.bf16.gmra.mxu0 %v263
    %v369 = vpop.f32.mrf.mxu0
    %v370 = vadd.f32 %v285, %v369
    %v371 = vpop.f32.mrf.mxu0
    %v372 = vpop.f32.mrf.mxu0
    %v373 = vadd.f32 %v285, %v372
    %v374 = vpop.f32.mrf.mxu0
    %375 = vdwg.mxu0
    %v376 = vmax.f32 %v370, 0.0
    %v377 = vmax.f32 %v373, 0.0
    %v378 = vpack.c.bf16 %v377, %v376
    %v379 = vld [vmem:[#allocation8] sm:$0xf]
    %v380 = vld [vmem:[#allocation8 + $0x4] sm:$0xf]
    %v381 = vld [vmem:[#allocation8 + $0x8] sm:$0xf]
    %v382 = vld [vmem:[#allocation8 + $0xc] sm:$0xf]
    %v383 = vld [vmem:[#allocation8 + $0x10] sm:$0xf]
    %v384 = vld [vmem:[#allocation8 + $0x14] sm:$0xf]
    %v385 = vld [vmem:[#allocation8 + $0x18] sm:$0xf]
    %v386 = vld [vmem:[#allocation8 + $0x1c] sm:$0xf]
    %v387 = vld [vmem:[#allocation8 + $0x20] sm:$0xf]
    %v388 = vld [vmem:[#allocation8 + $0x24] sm:$0xf]
    %v389 = vld [vmem:[#allocation8 + $0x28] sm:$0xf]
    %v390 = vld [vmem:[#allocation8 + $0x2c] sm:$0xf]
    %v391 = vld [vmem:[#allocation8 + $0x30] sm:$0xf]
    %v392 = vld [vmem:[#allocation8 + $0x34] sm:$0xf]
    %v393 = vld [vmem:[#allocation8 + $0x38] sm:$0xf]
    %v394 = vld [vmem:[#allocation8 + $0x3c] sm:$0xf]
    %v395 = vld [vmem:[%s6] sm:$0x1]
    %v397 = vlaneseq
    %v398 = vshrl.u32 %v397, 7
    %v399 = vsub.s32 0, %v398
    %v400 = vrot.slane %v395, %v399
    %v418 = vunpack.c.l.b16 %v379
    %v419 = vunpack.c.l.b16 %v380
    %v420 = vunpack.c.l.b16 %v381
    %v421 = vunpack.c.l.b16 %v382
    %v422 = vunpack.c.l.b16 %v383
    %v423 = vunpack.c.l.b16 %v384
    %v424 = vunpack.c.l.b16 %v385
    %v425 = vunpack.c.l.b16 %v386
    %v426 = vunpack.c.l.b16 %v387
    %v427 = vunpack.c.l.b16 %v388
    %v428 = vunpack.c.l.b16 %v389
    %v429 = vunpack.c.l.b16 %v390
    %v430 = vunpack.c.l.b16 %v391
    %v431 = vunpack.c.l.b16 %v392
    %v432 = vunpack.c.l.b16 %v393
    %v433 = vunpack.c.l.b16 %v394
    %v434 = vpack.c.b16 %v419, %v418
    %v435 = vpack.c.b16 %v421, %v420
    %v436 = vpack.c.b16 %v423, %v422
    %v437 = vpack.c.b16 %v425, %v424
    %v438 = vpack.c.b16 %v427, %v426
    %v439 = vpack.c.b16 %v429, %v428
    %v440 = vpack.c.b16 %v431, %v430
    %v441 = vpack.c.b16 %v433, %v432
    %450 = vmatprep.subr.bf16.mxu0 0
    %451 = vmatpush1.bf16.msra.mxu0 %v441
    %452 = vmatprep.subr.bf16.mxu0 0
    %453 = vmatpush1.bf16.msra.mxu0 %v440
    %454 = vmatprep.subr.bf16.mxu0 0
    %455 = vmatpush1.bf16.msra.mxu0 %v439
    %456 = vmatprep.subr.bf16.mxu0 0
    %457 = vmatpush1.bf16.msra.mxu0 %v438
    %458 = vmatprep.subr.bf16.mxu0 0
    %459 = vmatpush1.bf16.msra.mxu0 %v437
    %460 = vmatprep.subr.bf16.mxu0 0
    %461 = vmatpush1.bf16.msra.mxu0 %v436
    %462 = vmatprep.subr.bf16.mxu0 0
    %463 = vmatpush1.bf16.msra.mxu0 %v435
    %464 = vmatprep.subr.bf16.mxu0 0
    %465 = vmatpush1.bf16.msra.mxu0 %v434
    %466 = vmatprep.subr.bf16.mxu0 0
    %467 = vmatpush2.bf16.msra.mxu0 0
    %468 = vmatprep.subr.bf16.mxu0 0
    %469 = vmatpush2.bf16.msra.mxu0 0
    %470 = vmatprep.subr.bf16.mxu0 0
    %471 = vmatpush2.bf16.msra.mxu0 0
    %472 = vmatprep.subr.bf16.mxu0 0
    %473 = vmatpush2.bf16.msra.mxu0 0
    %474 = vmatprep.subr.bf16.mxu0 0
    %475 = vmatpush2.bf16.msra.mxu0 0
    %476 = vmatprep.subr.bf16.mxu0 0
    %477 = vmatpush2.bf16.msra.mxu0 0
    %478 = vmatprep.subr.bf16.mxu0 0
    %479 = vmatpush2.bf16.msra.mxu0 0
    %480 = vmatprep.subr.bf16.mxu0 0
    %481 = vmatpush2.bf16.msra.mxu0 0
    %482 = vmatprep.mubr.bf16.mxu0 0
    %483 = vmatmul.mubr.bf16.gmra.mxu0 %v378
    %v484 = vpop.f32.mrf.mxu0
    %v485 = vadd.f32 %v400, %v484
    %v486 = vpop.f32.mrf.mxu0
    %v487 = vpop.f32.mrf.mxu0
    %v488 = vadd.f32 %v400, %v487
    %v489 = vpop.f32.mrf.mxu0
    %490 = vdwg.mxu0
    %v491 = vpack.c.bf16 %v488, %v485
    %v493 = vcombine.high %v491, %v491
    %v495 = vunpack.c.l.s4 1966171168
    %v496 = vunpack.c.0.s8 %v495
    %v497 = vlaneseq
    %v498 = vshrl.u32 %v497, 7
    %v499 = vsub.s32 %v496, %v498
    %v500 = vrot.slane %v491, %v499
    %v502 = vunpack.c.l.s4 1966171168
    %v503 = vunpack.c.0.s8 %v502
    %v504 = vlaneseq
    %v505 = vshrl.u32 %v504, 7
    %v506 = vsub.s32 %v503, %v505
    %v507 = vrot.slane %v493, %v506
    %v508 = vcombine.high %v500, %v500
    %v509 = vcombine.high %v507, %v507
    %v511 = vunpack.c.l.s4 1966171168
    %v512 = vunpack.c.0.s8 %v511
    %v513 = vlaneseq
    %v514 = vshrl.u32 %v513, 7
    %v515 = vsub.s32 %v512, %v514
    %v516 = vrot.slane %v500, %v515
    %v518 = vunpack.c.l.s4 1966171168
    %v519 = vunpack.c.0.s8 %v518
    %v520 = vlaneseq
    %v521 = vshrl.u32 %v520, 7
    %v522 = vsub.s32 %v519, %v521
    %v523 = vrot.slane %v507, %v522
    %v525 = vunpack.c.l.s4 1966171168
    %v526 = vunpack.c.0.s8 %v525
    %v527 = vlaneseq
    %v528 = vshrl.u32 %v527, 7
    %v529 = vsub.s32 %v526, %v528
    %v530 = vrot.slane %v508, %v529
    %v532 = vunpack.c.l.s4 1966171168
    %v533 = vunpack.c.0.s8 %v532
    %v534 = vlaneseq
    %v535 = vshrl.u32 %v534, 7
    %v536 = vsub.s32 %v533, %v535
    %v537 = vrot.slane %v509, %v536
    %v538 = vcombine.high %v516, %v516
    %v539 = vcombine.high %v523, %v523
    %v540 = vcombine.high %v530, %v530
    %v541 = vcombine.high %v537, %v537
    %550 = vst [vmem:[#allocation10] sm:$0x1] %v516
    %551 = vst [vmem:[#allocation10 + $0x1] sm:$0x1] %v530
    %552 = vst [vmem:[#allocation10 + $0x2] sm:$0x1] %v538
    %553 = vst [vmem:[#allocation10 + $0x3] sm:$0x1] %v540
    %554 = vst [vmem:[#allocation10 + $0x4] sm:$0x1] %v523
    %555 = vst [vmem:[#allocation10 + $0x5] sm:$0x1] %v537
    %556 = vst [vmem:[#allocation10 + $0x6] sm:$0x1] %v539
    %557 = vst [vmem:[#allocation10 + $0x7] sm:$0x1] %v541
    // Predicated region
    $region46: #{tpu_custom_call.1} parent=1 // pred_check
      _
    $region47: #{tpu_custom_call.1} parent=1 // pred_check_branch
      %559 = sbr.rel (0) target = $region49
    $region48: #{tpu_custom_call.1} parent=1 // pred_region
      %s561 = ssub.s32 128, 16
      %562 = vsyncadd [#allocation4], %s561
      %s563 = sshll.u32 [#allocation10], 4
      %s564 = int_to_ptr.vmem [resolvable:$true] %s563
      %569 = dma.vmem_to_hbm [thread:$0]  %s564, 16, %s7, [#allocation4], 16, 16, 1
    $region49: #{tpu_custom_call.1} parent=1 // pred_fallthru
      _
    // Predicated region
    $region50: #{tpu_custom_call.1} parent=1 // pred_check
      _
    $region51: #{tpu_custom_call.1} parent=1 // pred_check_branch
      %571 = sbr.rel (0) target = $region53
    $region52: #{tpu_custom_call.1} parent=1 // pred_region
      %572 = dma.done [#allocation4], 128
    $region53: #{tpu_custom_call.1} parent=1 // pred_fallthru
      _
    %573 = vsyncpa [#allocation3], 1
    %574 = vsyncpa [#allocation6], 1
    %575 = vsyncpa [#allocation9], 1
    %576 = vsyncpa [#allocation4], 1

</llo_original>
